<compile_context>
chip_gen: v7x
topology: tpu7x:2x2x1
jax: 0.10.0
libtpu: 0.0.40
codegen_flags: <defaults>
</compile_context>

<pallas_src>
import jax
import jax.numpy as jnp
from jax import lax
from jax.experimental import pallas as pl
from jax.experimental.pallas import tpu as pltpu


def actor_kernel(x_ref, p_ref, o_ref):
    # x_ref: (B, 4)   -- input exactly as the module receives it
    # p_ref: (8, 64)  -- packed params: [0:4]=W1, [4:5]=b1, [5:7]=W2^T, [7]=pad
    # o_ref: (B, 2)   -- softmax(fc2(relu(fc1(x)))), softmax over dim=0 (batch)
    x = x_ref[...]                                     # (B, 4)
    w1 = p_ref[0:4, :]                                 # (4, 64)
    b1 = p_ref[4:5, :]                                 # (1, 64), broadcasts over sublanes
    w2_t = p_ref[5:7, :]                               # (2, 64) == W2^T

    # fc1 + ReLU:  h = relu(x @ W1 + b1)  -> (B, 64)   [plain NN gemm]
    h = lax.dot_general(
        x, w1,
        dimension_numbers=(((1,), (0,)), ((), ())),
        preferred_element_type=jnp.float32,
    )
    h = jnp.maximum(h + b1, 0.0)

    # fc2:  logits = h @ W2 = h @ (W2^T)^T -> (B, 2)   [NT gemm, no explicit transpose]
    # fc2 bias omitted on purpose: it cancels exactly under softmax over dim=0.
    logits = lax.dot_general(
        h, w2_t,
        dimension_numbers=(((1,), (1,)), ((), ())),
        preferred_element_type=jnp.float32,
    )

    # softmax over dim=0 (the batch / sublane axis), numerically stable
    m = jnp.max(logits, axis=0, keepdims=True)         # (1, 2)
    e = jnp.exp(logits - m)                            # (B, 2)
    s = jnp.sum(e, axis=0, keepdims=True)              # (1, 2)
    r = pl.reciprocal(s, approx=True)                  # EUP slot
    r = r * (2.0 - s * r)                              # one Newton step -> ~f32 accuracy
    o_ref[...] = (e * r).astype(o_ref.dtype)


def actor_forward(x, packed_params):
    """x: (B, 4) f32, packed_params: (8, 64).  Returns (B, 2), softmax over dim=0."""
    B = x.shape[0]
    return pl.pallas_call(
        actor_kernel,
        out_shape=jax.ShapeDtypeStruct((B, 2), jnp.float32),
        # No grid: whole (tiny) arrays resident in VMEM; no (8,128) constraint
        # since each block equals the full array.
        in_specs=[
            pl.BlockSpec(memory_space=pltpu.MemorySpace.VMEM),   # x (B, 4)
            pl.BlockSpec(memory_space=pltpu.MemorySpace.VMEM),   # packed params (8, 64)
        ],
        out_specs=pl.BlockSpec(memory_space=pltpu.MemorySpace.VMEM),
        # Raise v5e's 16 MiB default scoped-VMEM limit (no-op on v6e/v7x defaults).
        compiler_params=pltpu.CompilerParams(vmem_limit_bytes=32 * 1024 * 1024),
    )(x, packed_params)


def pack_params(w1, b1, w2):
    """Pack W1 (4,64), b1 (64,) and W2^T (2,64) into one padded (8, 64) operand.

    Rows 0:4 = W1, row 4 = b1, rows 5:7 = W2^T, row 7 = zero pad (keeps the
    block at a full (8,128)-tile footprint).  fc2's bias is intentionally
    excluded: softmax over dim=0 cancels it.  Do this once, outside any
    per-step rollout loop.
    """
    return jnp.concatenate(
        [w1, b1.reshape(1, 64), w2.T, jnp.zeros((1, 64), jnp.float32)], axis=0
    )


def init_params(key):
    """Deterministic init mirroring nn.Linear defaults: U(-1/sqrt(fan_in), +)."""
    k1, k2, k3, k4 = jax.random.split(key, 4)
    bound1 = 1.0 / jnp.sqrt(4.0)
    bound2 = 1.0 / jnp.sqrt(64.0)
    w1 = jax.random.uniform(k1, (4, 64), jnp.float32, -bound1, bound1)   # (in, out)
    b1 = jax.random.uniform(k2, (64,), jnp.float32, -bound1, bound1)
    w2 = jax.random.uniform(k3, (64, 2), jnp.float32, -bound2, bound2)   # (in, out)
    b2 = jax.random.uniform(k4, (2,), jnp.float32, -bound2, bound2)      # ref only
    return w1, b1, w2, b2


def reference_forward(x, w1, b1, w2, b2):
    # Faithful to the PyTorch module, including b2 (which the kernel provably drops).
    h = jnp.maximum(x @ w1 + b1, 0.0)
    logits = h @ w2 + b2
    return jax.nn.softmax(logits, axis=0)   # dim=0 as in the PyTorch module


if __name__ == "__main__":
    key = jax.random.PRNGKey(0)
    kx, kp = jax.random.split(key)

    B = 8  # small batch; feature dim is fixed at 4 by the module
    x = jax.random.normal(kx, (B, 4), jnp.float32)
    w1, b1, w2, b2 = init_params(kp)
    packed = pack_params(w1, b1, w2)

    out = actor_forward(x, packed)
    out = jax.block_until_ready(out)

    ref = reference_forward(x, w1, b1, w2, b2)
    assert out.shape == (B, 2)
    # b2 cancels mathematically; small tolerance slack only for matmul
    # precision/ordering differences between the Pallas MXU path and XLA.
    assert jnp.allclose(out, ref, atol=1e-4, rtol=1e-4), "mismatch vs JAX reference"
    # softmax over dim=0: each of the 2 columns sums to 1 across the batch
    assert jnp.allclose(jnp.sum(out, axis=0), jnp.ones((2,)), atol=1e-5)

    print("KERNEL_OK")
</pallas_src>

<mosaic_0001>
module attributes {stable_mosaic.version = 11 : i64} {
  func.func @actor_kernel(%arg0: memref<8x4xf32, #tpu.memory_space<vmem>>, %arg1: memref<8x64xf32, #tpu.memory_space<vmem>>, %arg2: memref<8x2xf32, #tpu.memory_space<vmem>>) attributes {dimension_semantics = [], scalar_prefetch = 0 : i64, scratch_operands = 0 : i64, tpu.core_type = #tpu.core_type<tc>} {
    %c0 = arith.constant 0 : index
    %c0_0 = arith.constant 0 : index
    %0 = vector.load %arg0[%c0, %c0_0] : memref<8x4xf32, #tpu.memory_space<vmem>>, vector<8x4xf32>
    %c0_1 = arith.constant 0 : index
    %c0_2 = arith.constant 0 : index
    %1 = vector.load %arg1[%c0_1, %c0_2] : memref<8x64xf32, #tpu.memory_space<vmem>>, vector<4x64xf32>
    %c4 = arith.constant 4 : index
    %c0_3 = arith.constant 0 : index
    %2 = vector.load %arg1[%c4, %c0_3] : memref<8x64xf32, #tpu.memory_space<vmem>>, vector<1x64xf32>
    %c5 = arith.constant 5 : index
    %c0_4 = arith.constant 0 : index
    %3 = vector.load %arg1[%c5, %c0_4] : memref<8x64xf32, #tpu.memory_space<vmem>>, vector<2x64xf32>
    %cst = arith.constant dense<0.000000e+00> : vector<8x64xf32>
    %4 = tpu.matmul %0, %1, %cst {dimension_numbers = #tpu.dot_dimension_numbers<[1], [0], [0], [1], [0, 0, 1, 1], [], []>} : vector<8x4xf32>, vector<4x64xf32>, vector<8x64xf32> -> vector<8x64xf32>
    %5 = vector.broadcast %2 : vector<1x64xf32> to vector<8x64xf32>
    %6 = arith.addf %4, %5 : vector<8x64xf32>
    %cst_5 = arith.constant 0.000000e+00 : f32
    %7 = vector.broadcast %cst_5 : f32 to vector<8x64xf32>
    %8 = arith.maximumf %6, %7 : vector<8x64xf32>
    %cst_6 = arith.constant dense<0.000000e+00> : vector<8x2xf32>
    %9 = tpu.matmul %8, %3, %cst_6 {dimension_numbers = #tpu.dot_dimension_numbers<[1], [1], [0], [0], [0, 0, 1, 0], [], []>} : vector<8x64xf32>, vector<2x64xf32>, vector<8x2xf32> -> vector<8x2xf32>
    %cst_7 = arith.constant dense<0xFF800000> : vector<2xf32>
    %10 = vector.multi_reduction <maximumf>, %9, %cst_7 [0] : vector<8x2xf32> to vector<2xf32>
    %11 = vector.shape_cast %10 : vector<2xf32> to vector<1x2xf32>
    %12 = vector.broadcast %11 : vector<1x2xf32> to vector<8x2xf32>
    %13 = arith.subf %9, %12 : vector<8x2xf32>
    %14 = math.exp %13 : vector<8x2xf32>
    %cst_8 = arith.constant dense<0.000000e+00> : vector<2xf32>
    %15 = vector.multi_reduction <add>, %14, %cst_8 [0] : vector<8x2xf32> to vector<2xf32>
    %16 = vector.shape_cast %15 : vector<2xf32> to vector<1x2xf32>
    %17 = tpu.reciprocal %16 {approx = true} : vector<1x2xf32> -> vector<1x2xf32>
    %18 = arith.mulf %16, %17 : vector<1x2xf32>
    %cst_9 = arith.constant 2.000000e+00 : f32
    %19 = vector.broadcast %cst_9 : f32 to vector<1x2xf32>
    %20 = arith.subf %19, %18 : vector<1x2xf32>
    %21 = arith.mulf %17, %20 : vector<1x2xf32>
    %22 = vector.broadcast %21 : vector<1x2xf32> to vector<8x2xf32>
    %23 = arith.mulf %14, %22 : vector<8x2xf32>
    %c0_10 = arith.constant 0 : index
    %c0_11 = arith.constant 0 : index
    %24 = vector.load %arg2[%c0_10, %c0_11] : memref<8x2xf32, #tpu.memory_space<vmem>>, vector<8x2xf32>
    tpu.vector_store %arg2[%c0_10, %c0_11], %23 {strides = array<i32>} : memref<8x2xf32, #tpu.memory_space<vmem>>, vector<8x2xf32>,
    return
  }
}

</mosaic_0001>

<llo_original>
// kernel: tpu_custom_call.1
$region0: #{tpu_custom_call.1}
  #allocation0 [shape = 'u32[]', space=smem, size = 0x4, offset = 0x4, fixed_abs, tag = 'smem constant byte address 0x4 - core index']
  #allocation1 [shape = 'u32[144,128]{1,0:T(1,128)}', space=vmem, size = 0x12000, scoped, tag = 'internal scratch']
  %s0 = inlined_call_operand.vmem [shape: f32[8,4], index: 0, kind: input, shape index: {}]
  %s1 = inlined_call_operand.vmem [shape: f32[8,64], index: 1, kind: input, shape index: {}]
  %s2 = inlined_call_operand.vmem [shape: f32[8,2], index: 2, kind: output, shape index: {}]
  %s3 = sld [smem:[#allocation0]]
  $region18: #{tpu_custom_call.1} parent=0
    _
  %s5 = ssub.s32 1, %s3
  %s6 = scalar_select 0, %s5, %s3
  // Predicated region
  $region2: #{tpu_custom_call.1} parent=0 // pred_check
    _
  $region3: #{tpu_custom_call.1} parent=0 // pred_check_branch
    %8 = sbr.rel (0) target = $region5
  $region4: #{tpu_custom_call.1} parent=0 // pred_region
    _
  $region5: #{tpu_custom_call.1} parent=0 // pred_fallthru
    _
  // Predicated region
  $region6: #{tpu_custom_call.1} parent=0 // pred_check
    _
  $region7: #{tpu_custom_call.1} parent=0 // pred_check_branch
    %10 = sbr.rel (0) target = $region9
  $region8: #{tpu_custom_call.1} parent=0 // pred_region
    _
  $region9: #{tpu_custom_call.1} parent=0 // pred_fallthru
    _
  %v11 = vld [vmem:[%s0] sm:$0xff]
  %v12 = vld [vmem:[%s1] sm:$0xf]
  %v13 = vld [vmem:[%s1 + $0x4] sm:$0x1]
  %v14 = vld [vmem:[%s1 + $0x5] sm:$0x3]
  %v15 = vlaneseq
  %v16 = vshrl.u32 %v15, 7
  %v17 = vsub.s32 0, %v16
  %v18 = vrot.slane %v13, %v17
  %vm19 = vcmask 31744
  %v21 = vsel %vm19, %v11, 0
  %vm23 = vcmask 1043456
  %v25 = vsel %vm23, %v12, 0
  %27 = vmatprep.subr.mxu0 0.0
  %28 = vmatpush1.msra.mxu0 %v25
  %29 = vmatprep.subr.mxu0 0.0
  %30 = vmatpush1.msra.mxu0 0.0
  %31 = vmatprep.subr.mxu0 0.0
  %32 = vmatpush1.msra.mxu0 0.0
  %33 = vmatprep.subr.mxu0 0.0
  %34 = vmatpush1.msra.mxu0 0.0
  %35 = vmatprep.subr.mxu0 0.0
  %36 = vmatpush1.msra.mxu0 0.0
  %37 = vmatprep.subr.mxu0 0.0
  %38 = vmatpush1.msra.mxu0 0.0
  %39 = vmatprep.subr.mxu0 0.0
  %40 = vmatpush1.msra.mxu0 0.0
  %41 = vmatprep.subr.mxu0 0.0
  %42 = vmatpush1.msra.mxu0 0.0
  %43 = vmatprep.subr.mxu0 0.0
  %44 = vmatpush1.msra.mxu0 0.0
  %45 = vmatprep.subr.mxu0 0.0
  %46 = vmatpush1.msra.mxu0 0.0
  %47 = vmatprep.subr.mxu0 0.0
  %48 = vmatpush1.msra.mxu0 0.0
  %49 = vmatprep.subr.mxu0 0.0
  %50 = vmatpush1.msra.mxu0 0.0
  %51 = vmatprep.subr.mxu0 0.0
  %52 = vmatpush1.msra.mxu0 0.0
  %53 = vmatprep.subr.mxu0 0.0
  %54 = vmatpush1.msra.mxu0 0.0
  %55 = vmatprep.subr.mxu0 0.0
  %56 = vmatpush1.msra.mxu0 0.0
  %57 = vmatprep.subr.mxu0 0.0
  %58 = vmatpush1.msra.mxu0 0.0
  %59 = vmatprep.subr.mxu0 0.0
  %60 = vmatpush1.msra.mxu0 0.0
  %61 = vmatprep.subr.mxu0 0.0
  %62 = vmatpush1.msra.mxu0 0.0
  %63 = vmatprep.subr.mxu0 0.0
  %64 = vmatpush1.msra.mxu0 0.0
  %65 = vmatprep.subr.mxu0 0.0
  %66 = vmatpush1.msra.mxu0 0.0
  %67 = vmatprep.subr.mxu0 0.0
  %68 = vmatpush1.msra.mxu0 0.0
  %69 = vmatprep.subr.mxu0 0.0
  %70 = vmatpush1.msra.mxu0 0.0
  %71 = vmatprep.subr.mxu0 0.0
  %72 = vmatpush1.msra.mxu0 0.0
  %73 = vmatprep.subr.mxu0 0.0
  %74 = vmatpush1.msra.mxu0 0.0
  %75 = vmatprep.subr.mxu0 0.0
  %76 = vmatpush1.msra.mxu0 0.0
  %77 = vmatprep.subr.mxu0 0.0
  %78 = vmatpush1.msra.mxu0 0.0
  %79 = vmatprep.subr.mxu0 0.0
  %80 = vmatpush1.msra.mxu0 0.0
  %81 = vmatprep.subr.mxu0 0.0
  %82 = vmatpush1.msra.mxu0 0.0
  %83 = vmatprep.subr.mxu0 0.0
  %84 = vmatpush1.msra.mxu0 0.0
  %85 = vmatprep.subr.mxu0 0.0
  %86 = vmatpush1.msra.mxu0 0.0
  %87 = vmatprep.subr.mxu0 0.0
  %88 = vmatpush1.msra.mxu0 0.0
  %89 = vmatprep.subr.mxu0 0.0
  %90 = vmatpush1.msra.mxu0 0.0
  %91 = vmatprep.mubr.f32.mxu0 0.0
  %92 = vmatmul.mubr.f32.gmra.mrb[0].mxu0 %v21
  %v93 = vpop.f32.mrb[0].mxu0
  %v94 = vadd.f32 %v18, %v93
  %v95 = vpop.f32.mrb[0].mxu0
  %96 = vdwg.mxu0
  %v97 = vmax.f32 %v94, 0.0
  %vm98 = vcmask 523264
  %v100 = vsel %vm98, %v97, 0
  %v103 = vsel %vm98, %v14, 0
  %105 = vmatprep.subr.mxu0 0.0
  %106 = vmatpush1.xpose.msra.mxu0 %v103
  %107 = vmatprep.subr.mxu0 0.0
  %108 = vmatpush1.xpose.msra.mxu0 0.0
  %109 = vmatprep.subr.mxu0 0.0
  %110 = vmatpush1.xpose.msra.mxu0 0.0
  %111 = vmatprep.subr.mxu0 0.0
  %112 = vmatpush1.xpose.msra.mxu0 0.0
  %113 = vmatprep.subr.mxu0 0.0
  %114 = vmatpush1.xpose.msra.mxu0 0.0
  %115 = vmatprep.subr.mxu0 0.0
  %116 = vmatpush1.xpose.msra.mxu0 0.0
  %117 = vmatprep.subr.mxu0 0.0
  %118 = vmatpush1.xpose.msra.mxu0 0.0
  %119 = vmatprep.subr.mxu0 0.0
  %120 = vmatpush1.xpose.msra.mxu0 0.0
  %121 = vmatprep.subr.mxu0 0.0
  %122 = vmatpush1.xpose.msra.mxu0 0.0
  %123 = vmatprep.subr.mxu0 0.0
  %124 = vmatpush1.xpose.msra.mxu0 0.0
  %125 = vmatprep.subr.mxu0 0.0
  %126 = vmatpush1.xpose.msra.mxu0 0.0
  %127 = vmatprep.subr.mxu0 0.0
  %128 = vmatpush1.xpose.msra.mxu0 0.0
  %129 = vmatprep.subr.mxu0 0.0
  %130 = vmatpush1.xpose.msra.mxu0 0.0
  %131 = vmatprep.subr.mxu0 0.0
  %132 = vmatpush1.xpose.msra.mxu0 0.0
  %133 = vmatprep.subr.mxu0 0.0
  %134 = vmatpush1.xpose.msra.mxu0 0.0
  %135 = vmatprep.subr.mxu0 0.0
  %136 = vmatpush1.xpose.msra.mxu0 0.0
  %137 = vmatprep.subr.mxu0 0.0
  %138 = vmatpush1.xpose.msra.mxu0 0.0
  %139 = vmatprep.subr.mxu0 0.0
  %140 = vmatpush1.xpose.msra.mxu0 0.0
  %141 = vmatprep.subr.mxu0 0.0
  %142 = vmatpush1.xpose.msra.mxu0 0.0
  %143 = vmatprep.subr.mxu0 0.0
  %144 = vmatpush1.xpose.msra.mxu0 0.0
  %145 = vmatprep.subr.mxu0 0.0
  %146 = vmatpush1.xpose.msra.mxu0 0.0
  %147 = vmatprep.subr.mxu0 0.0
  %148 = vmatpush1.xpose.msra.mxu0 0.0
  %149 = vmatprep.subr.mxu0 0.0
  %150 = vmatpush1.xpose.msra.mxu0 0.0
  %151 = vmatprep.subr.mxu0 0.0
  %152 = vmatpush1.xpose.msra.mxu0 0.0
  %153 = vmatprep.subr.mxu0 0.0
  %154 = vmatpush1.xpose.msra.mxu0 0.0
  %155 = vmatprep.subr.mxu0 0.0
  %156 = vmatpush1.xpose.msra.mxu0 0.0
  %157 = vmatprep.subr.mxu0 0.0
  %158 = vmatpush1.xpose.msra.mxu0 0.0
  %159 = vmatprep.subr.mxu0 0.0
  %160 = vmatpush1.xpose.msra.mxu0 0.0
  %161 = vmatprep.subr.mxu0 0.0
  %162 = vmatpush1.xpose.msra.mxu0 0.0
  %163 = vmatprep.subr.mxu0 0.0
  %164 = vmatpush1.xpose.msra.mxu0 0.0
  %165 = vmatprep.subr.mxu0 0.0
  %166 = vmatpush1.xpose.msra.mxu0 0.0
  %167 = vmatprep.subr.mxu0 0.0
  %168 = vmatpush1.xpose.msra.mxu0 0.0
  %169 = vmatprep.mubr.f32.mxu0 0.0
  %170 = vmatmul.mubr.f32.gmra.mrb[0].mxu0 %v100
  %v171 = vpop.f32.mrb[0].mxu0
  %v172 = vadd.f32 0.0, %v171
  %v173 = vpop.f32.mrb[0].mxu0
  %174 = vdwg.mxu0
  %vm175 = vcmask 15360
  %v176 = vsel %vm175, %v172, -inf
  %v177 = vrot.slane %v176, 4
  %v178 = vmax.f32 %v176, %v177
  %v179 = vrot.slane %v178, 2
  %v180 = vmax.f32 %v178, %v179
  %v181 = vrot.slane %v180, 1
  %v182 = vmax.f32 %v180, %v181
  %v183 = vsub.f32 %v172, %v182
  %v184 = vmul.f32 %v183, 1.442695
  %v185 = vpow.pop %v184
  %v186 = vsel %vm175, %v185, 0.0
  %v187 = vrot.slane %v186, 4
  %v188 = vadd.f32 %v186, %v187
  %v189 = vrot.slane %v188, 2
  %v190 = vadd.f32 %v188, %v189
  %v191 = vrot.slane %v190, 1
  %v192 = vadd.f32 %v190, %v191
  %v193 = vrcp.pop %v192
  %v194 = vmul.f32 %v192, %v193
  %v195 = vsub.f32 2.0, %v194
  %v196 = vmul.f32 %v193, %v195
  %v197 = vmul.f32 %v185, %v196
  %198 = vst.msk [vmem:[%s2] sm:$0xff] %vm175, %v197
  // Predicated region
  $region10: #{tpu_custom_call.1} parent=0 // pred_check
    _
  $region11: #{tpu_custom_call.1} parent=0 // pred_check_branch
    %200 = sbr.rel (0) target = $region13
  $region12: #{tpu_custom_call.1} parent=0 // pred_region
    _
  $region13: #{tpu_custom_call.1} parent=0 // pred_fallthru
    _
  // Predicated region
  $region14: #{tpu_custom_call.1} parent=0 // pred_check
    _
  $region15: #{tpu_custom_call.1} parent=0 // pred_check_branch
    %202 = sbr.rel (0) target = $region17
  $region16: #{tpu_custom_call.1} parent=0 // pred_region
    _
  $region17: #{tpu_custom_call.1} parent=0 // pred_fallthru
    _

</llo_original>
